<compile_context>
chip_gen: v7x
topology: tpu7x:2x2x1
jax: 0.10.0
libtpu: 0.0.40
codegen_flags: <defaults>
</compile_context>

<pallas_src>
import functools

import jax
import jax.numpy as jnp
from jax.experimental import pallas as pl
from jax.experimental.pallas import tpu as pltpu

_IGNORE_LB = 255
_SMOOTH = 1.0


def _dice_ce_kernel(logits_ref, labels_ref,
                    ce_out, inter_out, psum_out, valid_out,
                    ce_acc, inter_acc, psum_acc, valid_acc,
                    *, hw, ignore_lb):
    """Grid = (N, num_tiles). Axis 0 is parallel (per-sample partials),
    axis 1 streams tiles of the flattened spatial dim."""
    t = pl.program_id(1)
    last_t = pl.num_programs(1) - 1

    @pl.when(t == 0)
    def _init():
        ce_acc[...] = jnp.zeros_like(ce_acc)
        inter_acc[...] = jnp.zeros_like(inter_acc)
        psum_acc[...] = jnp.zeros_like(psum_acc)
        valid_acc[...] = jnp.zeros_like(valid_acc)

    x = logits_ref[...].astype(jnp.float32)        # (1, C, TW)
    lab = labels_ref[...]                          # (1, 1, TW) int32
    c = x.shape[1]
    tw = x.shape[2]

    # Mask for padded pixels (global pixel index >= hw contributes nothing).
    pix = jax.lax.broadcasted_iota(jnp.int32, (1, 1, tw), 2) + t * tw
    in_bounds = (pix < hw).astype(jnp.float32)     # (1, 1, TW)

    is_ignore = (lab == ignore_lb)
    lab_eff = jnp.where(is_ignore, 0, lab)         # label[ignore] = 0
    valid = jnp.where(is_ignore, 0.0, 1.0) * in_bounds   # (1, 1, TW)

    cls = jax.lax.broadcasted_iota(jnp.int32, (1, c, tw), 1)
    onehot = (cls == lab_eff).astype(jnp.float32)  # (1, C, TW)

    # Cross-entropy per pixel: logsumexp_c(x) - x[label]
    m = jnp.max(x, axis=1, keepdims=True)
    lse = m + jnp.log(jnp.sum(jnp.exp(x - m), axis=1, keepdims=True))
    logit_true = jnp.sum(x * onehot, axis=1, keepdims=True)
    ce_pix = (lse - logit_true) * in_bounds        # (1, 1, TW)

    # Dice statistics per pixel.
    p = jax.nn.sigmoid(x)                          # (1, C, TW)
    psum_pix = jnp.sum(p, axis=1, keepdims=True) * in_bounds      # probs not ignore-masked
    inter_pix = jnp.sum(p * onehot, axis=1, keepdims=True) * valid

    # Lane-wide accumulation: pure VPU adds, no per-step cross-lane reductions.
    ce_acc[...] += ce_pix
    inter_acc[...] += inter_pix
    psum_acc[...] += psum_pix
    valid_acc[...] += valid

    @pl.when(t == last_t)
    def _finalize():
        # One cross-lane reduction per quantity, once per sample.
        ce_out[...] = jnp.sum(ce_acc[...], axis=2, keepdims=True)
        inter_out[...] = jnp.sum(inter_acc[...], axis=2, keepdims=True)
        psum_out[...] = jnp.sum(psum_acc[...], axis=2, keepdims=True)
        valid_out[...] = jnp.sum(valid_acc[...], axis=2, keepdims=True)


def _pick_tile_width(hw, c, logit_bytes, label_bytes, budget_bytes):
    # Resident VMEM ≈ 2 double-buffered inputs + 4 f32 lane-wide accumulators:
    #   2*(c*tw*logit_bytes + tw*label_bytes) + 4*tw*4
    per_lane = 2 * (c * logit_bytes + label_bytes) + 16
    tw = budget_bytes // per_lane
    tw = max(128, (tw // 128) * 128)
    hw_ceil = pl.cdiv(hw, 128) * 128
    return min(tw, hw_ceil)


def dice_and_ce_loss(logits, label, *, ignore_lb=_IGNORE_LB, smooth=_SMOOTH,
                     ce_weight=0.6, dc_weight=0.4,
                     vmem_budget_bytes=16 * 1024 * 1024):
    n, c, h, w = logits.shape
    hw = h * w

    # Stream native dtypes; cast happens inside the kernel.
    x = logits.reshape(n, c, hw)
    lab = label.astype(jnp.int32).reshape(n, 1, hw)

    tw = _pick_tile_width(hw, c, x.dtype.itemsize, 4, vmem_budget_bytes)
    hw_pad = pl.cdiv(hw, tw) * tw
    if hw_pad != hw:
        x = jnp.pad(x, ((0, 0), (0, 0), (0, hw_pad - hw)))
        lab = jnp.pad(lab, ((0, 0), (0, 0), (0, hw_pad - hw)))
    n_tiles = hw_pad // tw

    kernel = functools.partial(_dice_ce_kernel, hw=hw, ignore_lb=ignore_lb)
    out_sds = jax.ShapeDtypeStruct((n, 1, 1), jnp.float32)
    scalar_out_spec = pl.BlockSpec((1, 1, 1), lambda i, t: (i, 0, 0))

    ce_p, inter_p, psum_p, valid_p = pl.pallas_call(
        kernel,
        out_shape=(out_sds, out_sds, out_sds, out_sds),
        grid_spec=pltpu.PrefetchScalarGridSpec(
            num_scalar_prefetch=0,
            grid=(n, n_tiles),
            in_specs=[
                pl.BlockSpec((1, c, tw), lambda i, t: (i, 0, t)),
                pl.BlockSpec((1, 1, tw), lambda i, t: (i, 0, t)),
            ],
            out_specs=[scalar_out_spec] * 4,
            scratch_shapes=[pltpu.VMEM((1, 1, tw), jnp.float32)] * 4,
        ),
        compiler_params=pltpu.CompilerParams(
            dimension_semantics=("parallel", "arbitrary"),
            vmem_limit_bytes=32 * 1024 * 1024),
    )(x, lab)

    # Tiny final combine in plain JAX (keeps the N grid axis parallel-safe).
    ce_loss = jnp.sum(ce_p) / jnp.float32(n * hw)
    numer = jnp.sum(inter_p)
    denom = jnp.sum(psum_p) + jnp.sum(valid_p)
    dc_loss = 1.0 - (2.0 * numer + smooth) / (denom + smooth)
    return ce_weight * ce_loss + dc_weight * dc_loss


def _reference(logits, label, *, ignore_lb=_IGNORE_LB, smooth=_SMOOTH):
    n, c, h, w = logits.shape
    x = logits.astype(jnp.float32)
    ignore = (label == ignore_lb)
    lab = jnp.where(ignore, 0, label).astype(jnp.int32)
    oh = jax.nn.one_hot(lab, c, axis=1, dtype=jnp.float32)           # (N,C,H,W)
    oh_dice = oh * (~ignore)[:, None, :, :].astype(jnp.float32)

    probs = jax.nn.sigmoid(x)
    numer = jnp.sum(probs * oh_dice)
    denom = jnp.sum(probs) + jnp.sum(oh_dice)
    dc = 1.0 - (2.0 * numer + smooth) / (denom + smooth)

    logp = jax.nn.log_softmax(x, axis=1)
    ce = -jnp.mean(jnp.sum(logp * oh, axis=1))
    return 0.6 * ce + 0.4 * dc


if __name__ == "__main__":
    key = jax.random.PRNGKey(0)
    k1, k2 = jax.random.split(key)
    # Shapes consistent with the module: logits (N,C,H,W), integer labels (N,H,W).
    logits = jax.random.normal(k1, (2, 4, 16, 16), dtype=jnp.float32)
    label = jax.random.randint(k2, (2, 16, 16), 0, 4, dtype=jnp.int32)

    loss = jax.jit(dice_and_ce_loss)(logits, label)
    jax.block_until_ready(loss)

    ref = _reference(logits, label)
    assert jnp.allclose(loss, ref, atol=1e-5, rtol=1e-5), (loss, ref)
    print("KERNEL_OK")
</pallas_src>

<mosaic_0001>
module attributes {stable_mosaic.version = 11 : i64} {
  func.func @_dice_ce_kernel(%arg0: i32, %arg1: i32, %arg2: memref<1x4x256xf32, #tpu.memory_space<vmem>>, %arg3: memref<1x1x256xi32, #tpu.memory_space<vmem>>, %arg4: memref<1x1x1xf32, #tpu.memory_space<vmem>>, %arg5: memref<1x1x1xf32, #tpu.memory_space<vmem>>, %arg6: memref<1x1x1xf32, #tpu.memory_space<vmem>>, %arg7: memref<1x1x1xf32, #tpu.memory_space<vmem>>, %arg8: memref<1x1x256xf32, #tpu.memory_space<vmem>>, %arg9: memref<1x1x256xf32, #tpu.memory_space<vmem>>, %arg10: memref<1x1x256xf32, #tpu.memory_space<vmem>>, %arg11: memref<1x1x256xf32, #tpu.memory_space<vmem>>) attributes {dimension_semantics = [#tpu.dimension_semantics<parallel>, #tpu.dimension_semantics<arbitrary>], iteration_bounds = array<i64: 2, 1>, scalar_prefetch = 0 : i64, scratch_operands = 4 : i64, tpu.core_type = #tpu.core_type<tc>, window_params = [{transform_indices = @transform_0, window_bounds = array<i64: 1, 4, 256>}, {transform_indices = @transform_1, window_bounds = array<i64: 1, 1, 256>}, {transform_indices = @transform_2, window_bounds = array<i64: 1, 1, 1>}, {transform_indices = @transform_3, window_bounds = array<i64: 1, 1, 1>}, {transform_indices = @transform_4, window_bounds = array<i64: 1, 1, 1>}, {transform_indices = @transform_5, window_bounds = array<i64: 1, 1, 1>}]} {
    %c0_i32 = arith.constant 0 : i32
    %0 = arith.cmpi eq, %arg1, %c0_i32 : i32
    %1 = arith.extui %0 : i1 to i32
    %c0_i32_0 = arith.constant 0 : i32
    %2 = arith.cmpi ne, %1, %c0_i32_0 : i32
    scf.if %2 {
      %cst_41 = arith.constant 0.000000e+00 : f32
      %67 = vector.broadcast %cst_41 : f32 to vector<1x1x256xf32>
      %c0_42 = arith.constant 0 : index
      %c0_43 = arith.constant 0 : index
      %c0_44 = arith.constant 0 : index
      %68 = vector.load %arg8[%c0_42, %c0_43, %c0_44] : memref<1x1x256xf32, #tpu.memory_space<vmem>>, vector<1x1x256xf32>
      tpu.vector_store %arg8[%c0_42, %c0_43, %c0_44], %67 {strides = array<i32>} : memref<1x1x256xf32, #tpu.memory_space<vmem>>, vector<1x1x256xf32>,
      %cst_45 = arith.constant 0.000000e+00 : f32
      %69 = vector.broadcast %cst_45 : f32 to vector<1x1x256xf32>
      %c0_46 = arith.constant 0 : index
      %c0_47 = arith.constant 0 : index
      %c0_48 = arith.constant 0 : index
      %70 = vector.load %arg9[%c0_46, %c0_47, %c0_48] : memref<1x1x256xf32, #tpu.memory_space<vmem>>, vector<1x1x256xf32>
      tpu.vector_store %arg9[%c0_46, %c0_47, %c0_48], %69 {strides = array<i32>} : memref<1x1x256xf32, #tpu.memory_space<vmem>>, vector<1x1x256xf32>,
      %cst_49 = arith.constant 0.000000e+00 : f32
      %71 = vector.broadcast %cst_49 : f32 to vector<1x1x256xf32>
      %c0_50 = arith.constant 0 : index
      %c0_51 = arith.constant 0 : index
      %c0_52 = arith.constant 0 : index
      %72 = vector.load %arg10[%c0_50, %c0_51, %c0_52] : memref<1x1x256xf32, #tpu.memory_space<vmem>>, vector<1x1x256xf32>
      tpu.vector_store %arg10[%c0_50, %c0_51, %c0_52], %71 {strides = array<i32>} : memref<1x1x256xf32, #tpu.memory_space<vmem>>, vector<1x1x256xf32>,
      %cst_53 = arith.constant 0.000000e+00 : f32
      %73 = vector.broadcast %cst_53 : f32 to vector<1x1x256xf32>
      %c0_54 = arith.constant 0 : index
      %c0_55 = arith.constant 0 : index
      %c0_56 = arith.constant 0 : index
      %74 = vector.load %arg11[%c0_54, %c0_55, %c0_56] : memref<1x1x256xf32, #tpu.memory_space<vmem>>, vector<1x1x256xf32>
      tpu.vector_store %arg11[%c0_54, %c0_55, %c0_56], %73 {strides = array<i32>} : memref<1x1x256xf32, #tpu.memory_space<vmem>>, vector<1x1x256xf32>,
    } else {
    }
    %c0 = arith.constant 0 : index
    %c0_1 = arith.constant 0 : index
    %c0_2 = arith.constant 0 : index
    %3 = vector.load %arg2[%c0, %c0_1, %c0_2] : memref<1x4x256xf32, #tpu.memory_space<vmem>>, vector<1x4x256xf32>
    %c0_3 = arith.constant 0 : index
    %c0_4 = arith.constant 0 : index
    %c0_5 = arith.constant 0 : index
    %4 = vector.load %arg3[%c0_3, %c0_4, %c0_5] : memref<1x1x256xi32, #tpu.memory_space<vmem>>, vector<1x1x256xi32>
    %5 = tpu.iota {dimensions = array<i32: 2>} : vector<1x1x256xi32>
    %c256_i32 = arith.constant 256 : i32
    %6 = arith.muli %arg1, %c256_i32 : i32
    %7 = vector.broadcast %6 : i32 to vector<1x1x256xi32>
    %8 = arith.addi %5, %7 : vector<1x1x256xi32>
    %c256_i32_6 = arith.constant 256 : i32
    %9 = vector.broadcast %c256_i32_6 : i32 to vector<1x1x256xi32>
    %10 = arith.cmpi slt, %8, %9 : vector<1x1x256xi32>
    %11 = arith.extui %10 : vector<1x1x256xi1> to vector<1x1x256xi32>
    %12 = arith.sitofp %11 : vector<1x1x256xi32> to vector<1x1x256xf32>
    %c255_i32 = arith.constant 255 : i32
    %13 = vector.broadcast %c255_i32 : i32 to vector<1x1x256xi32>
    %14 = arith.cmpi eq, %4, %13 : vector<1x1x256xi32>
    %c0_i32_7 = arith.constant 0 : i32
    %15 = vector.broadcast %c0_i32_7 : i32 to vector<1x1x256xi32>
    %16 = arith.select %14, %15, %4 : vector<1x1x256xi1>, vector<1x1x256xi32>
    %cst = arith.constant 0.000000e+00 : f32
    %cst_8 = arith.constant 1.000000e+00 : f32
    %17 = vector.broadcast %cst : f32 to vector<1x1x256xf32>
    %18 = vector.broadcast %cst_8 : f32 to vector<1x1x256xf32>
    %19 = arith.select %14, %17, %18 : vector<1x1x256xi1>, vector<1x1x256xf32>
    %20 = arith.mulf %19, %12 : vector<1x1x256xf32>
    %21 = tpu.iota {dimensions = array<i32: 1>} : vector<1x4x256xi32>
    %22 = vector.broadcast %16 : vector<1x1x256xi32> to vector<1x4x256xi32>
    %23 = arith.cmpi eq, %21, %22 : vector<1x4x256xi32>
    %24 = arith.extui %23 : vector<1x4x256xi1> to vector<1x4x256xi32>
    %25 = arith.sitofp %24 : vector<1x4x256xi32> to vector<1x4x256xf32>
    %cst_9 = arith.constant dense<0xFF800000> : vector<1x256xf32>
    %26 = vector.multi_reduction <maximumf>, %3, %cst_9 [1] : vector<1x4x256xf32> to vector<1x256xf32>
    %27 = vector.shape_cast %26 : vector<1x256xf32> to vector<1x1x256xf32>
    %28 = vector.broadcast %27 : vector<1x1x256xf32> to vector<1x4x256xf32>
    %29 = arith.subf %3, %28 : vector<1x4x256xf32>
    %30 = math.exp %29 : vector<1x4x256xf32>
    %cst_10 = arith.constant dense<0.000000e+00> : vector<1x256xf32>
    %31 = vector.multi_reduction <add>, %30, %cst_10 [1] : vector<1x4x256xf32> to vector<1x256xf32>
    %32 = vector.shape_cast %31 : vector<1x256xf32> to vector<1x1x256xf32>
    %33 = math.log %32 : vector<1x1x256xf32>
    %34 = arith.addf %27, %33 : vector<1x1x256xf32>
    %35 = arith.mulf %3, %25 : vector<1x4x256xf32>
    %cst_11 = arith.constant dense<0.000000e+00> : vector<1x256xf32>
    %36 = vector.multi_reduction <add>, %35, %cst_11 [1] : vector<1x4x256xf32> to vector<1x256xf32>
    %37 = vector.shape_cast %36 : vector<1x256xf32> to vector<1x1x256xf32>
    %38 = arith.subf %34, %37 : vector<1x1x256xf32>
    %39 = arith.mulf %38, %12 : vector<1x1x256xf32>
    %40 = arith.negf %3 : vector<1x4x256xf32>
    %41 = math.exp %40 : vector<1x4x256xf32>
    %cst_12 = arith.constant 1.000000e+00 : f32
    %42 = vector.broadcast %cst_12 : f32 to vector<1x4x256xf32>
    %43 = arith.addf %42, %41 : vector<1x4x256xf32>
    %44 = arith.divf %42, %43 : vector<1x4x256xf32>
    %cst_13 = arith.constant dense<0.000000e+00> : vector<1x256xf32>
    %45 = vector.multi_reduction <add>, %44, %cst_13 [1] : vector<1x4x256xf32> to vector<1x256xf32>
    %46 = vector.shape_cast %45 : vector<1x256xf32> to vector<1x1x256xf32>
    %47 = arith.mulf %46, %12 : vector<1x1x256xf32>
    %48 = arith.mulf %44, %25 : vector<1x4x256xf32>
    %cst_14 = arith.constant dense<0.000000e+00> : vector<1x256xf32>
    %49 = vector.multi_reduction <add>, %48, %cst_14 [1] : vector<1x4x256xf32> to vector<1x256xf32>
    %50 = vector.shape_cast %49 : vector<1x256xf32> to vector<1x1x256xf32>
    %51 = arith.mulf %50, %20 : vector<1x1x256xf32>
    %c0_15 = arith.constant 0 : index
    %c0_16 = arith.constant 0 : index
    %c0_17 = arith.constant 0 : index
    %52 = vector.load %arg8[%c0_15, %c0_16, %c0_17] : memref<1x1x256xf32, #tpu.memory_space<vmem>>, vector<1x1x256xf32>
    %53 = arith.addf %52, %39 : vector<1x1x256xf32>
    %c0_18 = arith.constant 0 : index
    %c0_19 = arith.constant 0 : index
    %c0_20 = arith.constant 0 : index
    %54 = vector.load %arg8[%c0_18, %c0_19, %c0_20] : memref<1x1x256xf32, #tpu.memory_space<vmem>>, vector<1x1x256xf32>
    tpu.vector_store %arg8[%c0_18, %c0_19, %c0_20], %53 {strides = array<i32>} : memref<1x1x256xf32, #tpu.memory_space<vmem>>, vector<1x1x256xf32>,
    %c0_21 = arith.constant 0 : index
    %c0_22 = arith.constant 0 : index
    %c0_23 = arith.constant 0 : index
    %55 = vector.load %arg9[%c0_21, %c0_22, %c0_23] : memref<1x1x256xf32, #tpu.memory_space<vmem>>, vector<1x1x256xf32>
    %56 = arith.addf %55, %51 : vector<1x1x256xf32>
    %c0_24 = arith.constant 0 : index
    %c0_25 = arith.constant 0 : index
    %c0_26 = arith.constant 0 : index
    %57 = vector.load %arg9[%c0_24, %c0_25, %c0_26] : memref<1x1x256xf32, #tpu.memory_space<vmem>>, vector<1x1x256xf32>
    tpu.vector_store %arg9[%c0_24, %c0_25, %c0_26], %56 {strides = array<i32>} : memref<1x1x256xf32, #tpu.memory_space<vmem>>, vector<1x1x256xf32>,
    %c0_27 = arith.constant 0 : index
    %c0_28 = arith.constant 0 : index
    %c0_29 = arith.constant 0 : index
    %58 = vector.load %arg10[%c0_27, %c0_28, %c0_29] : memref<1x1x256xf32, #tpu.memory_space<vmem>>, vector<1x1x256xf32>
    %59 = arith.addf %58, %47 : vector<1x1x256xf32>
    %c0_30 = arith.constant 0 : index
    %c0_31 = arith.constant 0 : index
    %c0_32 = arith.constant 0 : index
    %60 = vector.load %arg10[%c0_30, %c0_31, %c0_32] : memref<1x1x256xf32, #tpu.memory_space<vmem>>, vector<1x1x256xf32>
    tpu.vector_store %arg10[%c0_30, %c0_31, %c0_32], %59 {strides = array<i32>} : memref<1x1x256xf32, #tpu.memory_space<vmem>>, vector<1x1x256xf32>,
    %c0_33 = arith.constant 0 : index
    %c0_34 = arith.constant 0 : index
    %c0_35 = arith.constant 0 : index
    %61 = vector.load %arg11[%c0_33, %c0_34, %c0_35] : memref<1x1x256xf32, #tpu.memory_space<vmem>>, vector<1x1x256xf32>
    %62 = arith.addf %61, %20 : vector<1x1x256xf32>
    %c0_36 = arith.constant 0 : index
    %c0_37 = arith.constant 0 : index
    %c0_38 = arith.constant 0 : index
    %63 = vector.load %arg11[%c0_36, %c0_37, %c0_38] : memref<1x1x256xf32, #tpu.memory_space<vmem>>, vector<1x1x256xf32>
    tpu.vector_store %arg11[%c0_36, %c0_37, %c0_38], %62 {strides = array<i32>} : memref<1x1x256xf32, #tpu.memory_space<vmem>>, vector<1x1x256xf32>,
    %c0_i32_39 = arith.constant 0 : i32
    %64 = arith.cmpi eq, %arg1, %c0_i32_39 : i32
    %65 = arith.extui %64 : i1 to i32
    %c0_i32_40 = arith.constant 0 : i32
    %66 = arith.cmpi ne, %65, %c0_i32_40 : i32
    scf.if %66 {
      %c0_41 = arith.constant 0 : index
      %c0_42 = arith.constant 0 : index
      %c0_43 = arith.constant 0 : index
      %67 = vector.load %arg8[%c0_41, %c0_42, %c0_43] : memref<1x1x256xf32, #tpu.memory_space<vmem>>, vector<1x1x256xf32>
      %cst_44 = arith.constant dense<0.000000e+00> : vector<1x1xf32>
      %68 = vector.multi_reduction <add>, %67, %cst_44 [2] : vector<1x1x256xf32> to vector<1x1xf32>
      %69 = vector.shape_cast %68 : vector<1x1xf32> to vector<1x1x1xf32>
      %c0_45 = arith.constant 0 : index
      %c0_46 = arith.constant 0 : index
      %c0_47 = arith.constant 0 : index
      %70 = vector.load %arg4[%c0_45, %c0_46, %c0_47] : memref<1x1x1xf32, #tpu.memory_space<vmem>>, vector<1x1x1xf32>
      tpu.vector_store %arg4[%c0_45, %c0_46, %c0_47], %69 {strides = array<i32>} : memref<1x1x1xf32, #tpu.memory_space<vmem>>, vector<1x1x1xf32>,
      %c0_48 = arith.constant 0 : index
      %c0_49 = arith.constant 0 : index
      %c0_50 = arith.constant 0 : index
      %71 = vector.load %arg9[%c0_48, %c0_49, %c0_50] : memref<1x1x256xf32, #tpu.memory_space<vmem>>, vector<1x1x256xf32>
      %cst_51 = arith.constant dense<0.000000e+00> : vector<1x1xf32>
      %72 = vector.multi_reduction <add>, %71, %cst_51 [2] : vector<1x1x256xf32> to vector<1x1xf32>
      %73 = vector.shape_cast %72 : vector<1x1xf32> to vector<1x1x1xf32>
      %c0_52 = arith.constant 0 : index
      %c0_53 = arith.constant 0 : index
      %c0_54 = arith.constant 0 : index
      %74 = vector.load %arg5[%c0_52, %c0_53, %c0_54] : memref<1x1x1xf32, #tpu.memory_space<vmem>>, vector<1x1x1xf32>
      tpu.vector_store %arg5[%c0_52, %c0_53, %c0_54], %73 {strides = array<i32>} : memref<1x1x1xf32, #tpu.memory_space<vmem>>, vector<1x1x1xf32>,
      %c0_55 = arith.constant 0 : index
      %c0_56 = arith.constant 0 : index
      %c0_57 = arith.constant 0 : index
      %75 = vector.load %arg10[%c0_55, %c0_56, %c0_57] : memref<1x1x256xf32, #tpu.memory_space<vmem>>, vector<1x1x256xf32>
      %cst_58 = arith.constant dense<0.000000e+00> : vector<1x1xf32>
      %76 = vector.multi_reduction <add>, %75, %cst_58 [2] : vector<1x1x256xf32> to vector<1x1xf32>
      %77 = vector.shape_cast %76 : vector<1x1xf32> to vector<1x1x1xf32>
      %c0_59 = arith.constant 0 : index
      %c0_60 = arith.constant 0 : index
      %c0_61 = arith.constant 0 : index
      %78 = vector.load %arg6[%c0_59, %c0_60, %c0_61] : memref<1x1x1xf32, #tpu.memory_space<vmem>>, vector<1x1x1xf32>
      tpu.vector_store %arg6[%c0_59, %c0_60, %c0_61], %77 {strides = array<i32>} : memref<1x1x1xf32, #tpu.memory_space<vmem>>, vector<1x1x1xf32>,
      %c0_62 = arith.constant 0 : index
      %c0_63 = arith.constant 0 : index
      %c0_64 = arith.constant 0 : index
      %79 = vector.load %arg11[%c0_62, %c0_63, %c0_64] : memref<1x1x256xf32, #tpu.memory_space<vmem>>, vector<1x1x256xf32>
      %cst_65 = arith.constant dense<0.000000e+00> : vector<1x1xf32>
      %80 = vector.multi_reduction <add>, %79, %cst_65 [2] : vector<1x1x256xf32> to vector<1x1xf32>
      %81 = vector.shape_cast %80 : vector<1x1xf32> to vector<1x1x1xf32>
      %c0_66 = arith.constant 0 : index
      %c0_67 = arith.constant 0 : index
      %c0_68 = arith.constant 0 : index
      %82 = vector.load %arg7[%c0_66, %c0_67, %c0_68] : memref<1x1x1xf32, #tpu.memory_space<vmem>>, vector<1x1x1xf32>
      tpu.vector_store %arg7[%c0_66, %c0_67, %c0_68], %81 {strides = array<i32>} : memref<1x1x1xf32, #tpu.memory_space<vmem>>, vector<1x1x1xf32>,
    } else {
    }
    return
  }
  func.func @transform_0(%arg0: i32, %arg1: i32) -> (i32, i32, i32) {
    %c0_i32 = arith.constant 0 : i32
    %c0_i32_0 = arith.constant 0 : i32
    return %arg0, %c0_i32, %arg1 : i32, i32, i32
  }
  func.func @transform_1(%arg0: i32, %arg1: i32) -> (i32, i32, i32) {
    %c0_i32 = arith.constant 0 : i32
    %c0_i32_0 = arith.constant 0 : i32
    return %arg0, %c0_i32, %arg1 : i32, i32, i32
  }
  func.func @transform_2(%arg0: i32, %arg1: i32) -> (i32, i32, i32) {
    %c0_i32 = arith.constant 0 : i32
    %c0_i32_0 = arith.constant 0 : i32
    %c0_i32_1 = arith.constant 0 : i32
    return %arg0, %c0_i32, %c0_i32_0 : i32, i32, i32
  }
  func.func @transform_3(%arg0: i32, %arg1: i32) -> (i32, i32, i32) {
    %c0_i32 = arith.constant 0 : i32
    %c0_i32_0 = arith.constant 0 : i32
    %c0_i32_1 = arith.constant 0 : i32
    return %arg0, %c0_i32, %c0_i32_0 : i32, i32, i32
  }
  func.func @transform_4(%arg0: i32, %arg1: i32) -> (i32, i32, i32) {
    %c0_i32 = arith.constant 0 : i32
    %c0_i32_0 = arith.constant 0 : i32
    %c0_i32_1 = arith.constant 0 : i32
    return %arg0, %c0_i32, %c0_i32_0 : i32, i32, i32
  }
  func.func @transform_5(%arg0: i32, %arg1: i32) -> (i32, i32, i32) {
    %c0_i32 = arith.constant 0 : i32
    %c0_i32_0 = arith.constant 0 : i32
    %c0_i32_1 = arith.constant 0 : i32
    return %arg0, %c0_i32, %c0_i32_0 : i32, i32, i32
  }
}

</mosaic_0001>

<llo_original>
// kernel: dice_and_ce_loss.1
$region0: #{dice_and_ce_loss.1}
  #allocation0 [shape = 'u32[]', space=smem, size = 0x4, offset = 0x4, fixed_abs, tag = 'smem constant byte address 0x4 - core index']
  #allocation1 [shape = 'u32[144,128]{1,0:T(1,128)}', space=vmem, size = 0x12000, scoped, tag = 'internal scratch']
  #allocation2 [shape = 'f32[1,1,256]{2,1,0:T(1,128)}', space=vmem, size = 0x400, scoped, tag = 'scratch operand']
  #allocation3 [shape = 'f32[1,1,256]{2,1,0:T(1,128)}', space=vmem, size = 0x400, scoped, tag = 'scratch operand']
  #allocation4 [shape = 'f32[1,1,256]{2,1,0:T(1,128)}', space=vmem, size = 0x400, scoped, tag = 'scratch operand']
  #allocation5 [shape = 'f32[1,1,256]{2,1,0:T(1,128)}', space=vmem, size = 0x400, scoped, tag = 'scratch operand']
  %s0 = inlined_call_operand.vmem [shape: f32[2,4,256], index: 0, kind: input, shape index: {}]
  %s1 = inlined_call_operand.vmem [shape: s32[2,1,256], index: 1, kind: input, shape index: {}]
  %s2 = inlined_call_operand.vmem [shape: f32[2,1,1], index: 2, kind: output, shape index: {0}]
  %s3 = inlined_call_operand.vmem [shape: f32[2,1,1], index: 3, kind: output, shape index: {1}]
  %s4 = inlined_call_operand.vmem [shape: f32[2,1,1], index: 4, kind: output, shape index: {2}]
  %s5 = inlined_call_operand.vmem [shape: f32[2,1,1], index: 5, kind: output, shape index: {3}]
  %6 = xla_tuple %s2, %s3, %s4, %s5
  %s7 = sld [smem:[#allocation0]]
  $region73: #{dice_and_ce_loss.1} parent=0
    _
  %s9 = ssub.s32 1, %s7
  %s10 = scalar_select 0, %s9, %s7
  loop: start=0, step=1, limit=4
  $region2: #{dice_and_ce_loss.1} parent=0 // loop_pre_header
    _
  $region3: #{dice_and_ce_loss.1} parent=0 // loop_header
    %s12 = sphi 0, %s16
    %p13 = scmp.ge.s32.totalorder %s12, 4
    %s19 = sphi 0, %s31
    %s20 = sphi 0, %s27
    %s21 = sphi 0, %s19
    %s22 = sphi 0, %s20
    %s23 = sphi 0, %s21
    %s24 = sphi 0, %s22
    %s36 = sphi 0, %s38
    %s39 = sphi 0, %s36
    %s40 = sphi 0, %s39
    %s56 = sphi 0, %s40
    %s64 = sphi 0, %s66
    %s67 = sphi 0, %s64
    %s68 = sphi 0, %s67
    %s84 = sphi 0, %s68
    %s90 = sphi 0, %s92
    %s93 = sphi 0, %s90
    %s94 = sphi 0, %s93
    %s110 = sphi 0, %s94
    %s116 = sphi 0, %s118
    %s119 = sphi 0, %s116
    %s120 = sphi 0, %s119
    %s136 = sphi 0, %s120
    %s142 = sphi 0, %s144
    %s145 = sphi 0, %s142
    %s146 = sphi 0, %s145
    %s162 = sphi 0, %s146
    %s168 = sphi 0, %s170
    %s171 = sphi 0, %s168
    %s172 = sphi 0, %s171
    %s188 = sphi 0, %s172
  $region4: #{dice_and_ce_loss.1} parent=0 // loop_header_branch
    %15 = sbr.rel (%p13) target = $region8
  $region5: #{dice_and_ce_loss.1} parent=0 // loop_body
    %s17 = ssub.s32 %s12, 1
    %s18 = ssub.s32 %s12, 2
    %s25 = sadd.s32 1, %s20
    %p26 = scmp.ge.s32.totalorder %s25, 1
    %s27 = scalar_select %p26, 0, %s25
    %s28 = sadd.s32 1, %s19
    %s29 = scalar_select %p26, %s28, %s19
    %p30 = scmp.ge.s32.totalorder %s29, 2
    %s31 = scalar_select %p30, 0, %s29
    %s32 = ssub.s32 %s19, %s31
    %s33 = ssub.s32 %s20, %s27
    %s34 = sor.u32 %s32, %s33
    %p35 = scmp.eq.s32.totalorder %s34, 0
    %s37 = sadd.s32 %s36, 1
    %s38 = scalar_select %p35, %s36, %s37
    %p41 = pneg %p35
    %p42 = scmp.eq.s32.totalorder %s12, 1
    %p43 = por %p41, %p42
    %p44 = scmp.ne.s32.totalorder %s36, %s39
    %p45 = scmp.eq.s32.totalorder %s12, 0
    %p46 = por %p44, %p45
    %p47 = scmp.ne.s32.totalorder %s36, %s39
    %p48 = scmp.eq.s32.totalorder %s17, 1
    %p49 = por %p47, %p48
    %p50 = scmp.ne.s32.totalorder %s39, %s40
    %p51 = scmp.eq.s32.totalorder %s17, 0
    %p52 = por %p50, %p51
    %p53 = scmp.ne.s32.totalorder %s39, %s40
    %p54 = scmp.eq.s32.totalorder %s18, 1
    %p55 = por %p53, %p54
    %p57 = scmp.ne.s32.totalorder %s40, %s56
    %p58 = scmp.eq.s32.totalorder %s18, 0
    %p59 = por %p57, %p58
    %s60 = ssub.s32 %s19, %s31
    %s61 = ssub.s32 %s20, %s27
    %s62 = sor.u32 %s60, %s61
    %p63 = scmp.eq.s32.totalorder %s62, 0
    %s65 = sadd.s32 %s64, 1
    %s66 = scalar_select %p63, %s64, %s65
    %p69 = pneg %p63
    %p70 = scmp.eq.s32.totalorder %s12, 1
    %p71 = por %p69, %p70
    %p72 = scmp.ne.s32.totalorder %s64, %s67
    %p73 = scmp.eq.s32.totalorder %s12, 0
    %p74 = por %p72, %p73
    %p75 = scmp.ne.s32.totalorder %s64, %s67
    %p76 = scmp.eq.s32.totalorder %s17, 1
    %p77 = por %p75, %p76
    %p78 = scmp.ne.s32.totalorder %s67, %s68
    %p79 = scmp.eq.s32.totalorder %s17, 0
    %p80 = por %p78, %p79
    %p81 = scmp.ne.s32.totalorder %s67, %s68
    %p82 = scmp.eq.s32.totalorder %s18, 1
    %p83 = por %p81, %p82
    %p85 = scmp.ne.s32.totalorder %s68, %s84
    %p86 = scmp.eq.s32.totalorder %s18, 0
    %p87 = por %p85, %p86
    %s88 = ssub.s32 %s19, %s31
    %p89 = scmp.eq.s32.totalorder %s88, 0
    %s91 = sadd.s32 %s90, 1
    %s92 = scalar_select %p89, %s90, %s91
    %p95 = pneg %p89
    %p96 = scmp.eq.s32.totalorder %s12, 1
    %p97 = por %p95, %p96
    %p98 = scmp.ne.s32.totalorder %s90, %s93
    %p99 = scmp.eq.s32.totalorder %s12, 0
    %p100 = por %p98, %p99
    %p101 = scmp.ne.s32.totalorder %s90, %s93
    %p102 = scmp.eq.s32.totalorder %s17, 1
    %p103 = por %p101, %p102
    %p104 = scmp.ne.s32.totalorder %s93, %s94
    %p105 = scmp.eq.s32.totalorder %s17, 0
    %p106 = por %p104, %p105
    %p107 = scmp.ne.s32.totalorder %s93, %s94
    %p108 = scmp.eq.s32.totalorder %s18, 1
    %p109 = por %p107, %p108
    %p111 = scmp.ne.s32.totalorder %s94, %s110
    %p112 = scmp.eq.s32.totalorder %s18, 0
    %p113 = por %p111, %p112
    %s114 = ssub.s32 %s19, %s31
    %p115 = scmp.eq.s32.totalorder %s114, 0
    %s117 = sadd.s32 %s116, 1
    %s118 = scalar_select %p115, %s116, %s117
    %p121 = pneg %p115
    %p122 = scmp.eq.s32.totalorder %s12, 1
    %p123 = por %p121, %p122
    %p124 = scmp.ne.s32.totalorder %s116, %s119
    %p125 = scmp.eq.s32.totalorder %s12, 0
    %p126 = por %p124, %p125
    %p127 = scmp.ne.s32.totalorder %s116, %s119
    %p128 = scmp.eq.s32.totalorder %s17, 1
    %p129 = por %p127, %p128
    %p130 = scmp.ne.s32.totalorder %s119, %s120
    %p131 = scmp.eq.s32.totalorder %s17, 0
    %p132 = por %p130, %p131
    %p133 = scmp.ne.s32.totalorder %s119, %s120
    %p134 = scmp.eq.s32.totalorder %s18, 1
    %p135 = por %p133, %p134
    %p137 = scmp.ne.s32.totalorder %s120, %s136
    %p138 = scmp.eq.s32.totalorder %s18, 0
    %p139 = por %p137, %p138
    %s140 = ssub.s32 %s19, %s31
    %p141 = scmp.eq.s32.totalorder %s140, 0
    %s143 = sadd.s32 %s142, 1
    %s144 = scalar_select %p141, %s142, %s143
    %p147 = pneg %p141
    %p148 = scmp.eq.s32.totalorder %s12, 1
    %p149 = por %p147, %p148
    %p150 = scmp.ne.s32.totalorder %s142, %s145
    %p151 = scmp.eq.s32.totalorder %s12, 0
    %p152 = por %p150, %p151
    %p153 = scmp.ne.s32.totalorder %s142, %s145
    %p154 = scmp.eq.s32.totalorder %s17, 1
    %p155 = por %p153, %p154
    %p156 = scmp.ne.s32.totalorder %s145, %s146
    %p157 = scmp.eq.s32.totalorder %s17, 0
    %p158 = por %p156, %p157
    %p159 = scmp.ne.s32.totalorder %s145, %s146
    %p160 = scmp.eq.s32.totalorder %s18, 1
    %p161 = por %p159, %p160
    %p163 = scmp.ne.s32.totalorder %s146, %s162
    %p164 = scmp.eq.s32.totalorder %s18, 0
    %p165 = por %p163, %p164
    %s166 = ssub.s32 %s19, %s31
    %p167 = scmp.eq.s32.totalorder %s166, 0
    %s169 = sadd.s32 %s168, 1
    %s170 = scalar_select %p167, %s168, %s169
    %p173 = pneg %p167
    %p174 = scmp.eq.s32.totalorder %s12, 1
    %p175 = por %p173, %p174
    %p176 = scmp.ne.s32.totalorder %s168, %s171
    %p177 = scmp.eq.s32.totalorder %s12, 0
    %p178 = por %p176, %p177
    %p179 = scmp.ne.s32.totalorder %s168, %s171
    %p180 = scmp.eq.s32.totalorder %s17, 1
    %p181 = por %p179, %p180
    %p182 = scmp.ne.s32.totalorder %s171, %s172
    %p183 = scmp.eq.s32.totalorder %s17, 0
    %p184 = por %p182, %p183
    %p185 = scmp.ne.s32.totalorder %s171, %s172
    %p186 = scmp.eq.s32.totalorder %s18, 1
    %p187 = por %p185, %p186
    %p189 = scmp.ne.s32.totalorder %s172, %s188
    %p190 = scmp.eq.s32.totalorder %s18, 0
    %p191 = por %p189, %p190
    %p192 = scmp.le.s32.totalorder 1, %s12
    %p193 = scmp.lt.s32.totalorder %s12, 3
    %p194 = pnand %p192, %p193
    %p195 = pneg %p194
    // Predicated region
    $region9: #{dice_and_ce_loss.1} parent=5 // pred_check
      _
    $region10: #{dice_and_ce_loss.1} parent=5 // pred_check_branch
      %197 = sbr.rel (%p194) target = $region12
    $region11: #{dice_and_ce_loss.1} parent=5 // pred_region
      %s198 = ssub.s32 %s12, 1
    $region12: #{dice_and_ce_loss.1} parent=5 // pred_fallthru
      _
    %p199 = scmp.lt.s32.totalorder %s12, 2
    // Predicated region
    $region13: #{dice_and_ce_loss.1} parent=5 // pred_check
      %p200 = pneg %p199
    $region14: #{dice_and_ce_loss.1} parent=5 // pred_check_branch
      %202 = sbr.rel (%p200) target = $region16
    $region15: #{dice_and_ce_loss.1} parent=5 // pred_region
      // Predicated region
      $region17: #{dice_and_ce_loss.1} parent=15 // pred_check
        %p203 = pneg %p46
      $region18: #{dice_and_ce_loss.1} parent=15 // pred_check_branch
        %205 = sbr.rel (%p203) target = $region20
      $region19: #{dice_and_ce_loss.1} parent=15 // pred_region
        %s206 = smul.u32 2, %s20
        %p207 = scmp.lt.s32.totalorder %s19, 1
        %s208 = scalar_select %p207, %s19, 1
        %p209 = scmp.lt.s32.totalorder %s206, 1
        %s210 = scalar_select %p209, %s206, 1
        %s211 = smul.addr %s208, 2
        %s212 = sadd.s32 %s210, %s211
        %s213 = smul.addr %s212, 4
        %s214 = scalar_lea.vmem %s0, %s213
        %s215 = smul.u32 2, %s20
      $region20: #{dice_and_ce_loss.1} parent=15 // pred_fallthru
        _
      // Predicated region
      $region21: #{dice_and_ce_loss.1} parent=15 // pred_check
        %p216 = pneg %p74
      $region22: #{dice_and_ce_loss.1} parent=15 // pred_check_branch
        %218 = sbr.rel (%p216) target = $region24
      $region23: #{dice_and_ce_loss.1} parent=15 // pred_region
        %s219 = smul.u32 2, %s20
        %p220 = scmp.lt.s32.totalorder %s19, 1
        %s221 = scalar_select %p220, %s19, 1
        %p222 = scmp.lt.s32.totalorder %s219, 1
        %s223 = scalar_select %p222, %s219, 1
        %s224 = smul.addr %s221, 2
        %s225 = sadd.s32 %s223, %s224
        %s226 = scalar_lea.vmem %s1, %s225
        %s227 = smul.u32 2, %s20
      $region24: #{dice_and_ce_loss.1} parent=15 // pred_fallthru
        _
    $region16: #{dice_and_ce_loss.1} parent=5 // pred_fallthru
      _
    %p228 = scmp.le.s32.totalorder 1, %s12
    %p229 = scmp.lt.s32.totalorder %s12, 3
    %p230 = pnand %p228, %p229
    %p231 = pneg %p230
    // Predicated region
    $region25: #{dice_and_ce_loss.1} parent=5 // pred_check
      _
    $region26: #{dice_and_ce_loss.1} parent=5 // pred_check_branch
      %233 = sbr.rel (%p230) target = $region28
    $region27: #{dice_and_ce_loss.1} parent=5 // pred_region
      %s234 = ssub.s32 %s12, 1
      %s235 = smul.u32 2, %s22
      %p236 = scmp.lt.s32.totalorder %s21, 1
      %s237 = scalar_select %p236, %s21, 1
      %p238 = scmp.lt.s32.totalorder %s235, 1
      %s239 = scalar_select %p238, %s235, 1
      %s240 = smul.addr %s237, 2
      %s241 = sadd.s32 %s239, %s240
      %s242 = smul.addr %s241, 4
      %s243 = scalar_lea.vmem %s0, %s242
      %p244 = pneg %p52
      %p245 = pneg %p49
      %s246 = smul.u32 2, %s22
      %p247 = scmp.lt.s32.totalorder %s21, 1
      %s248 = scalar_select %p247, %s21, 1
      %p249 = scmp.lt.s32.totalorder %s246, 1
      %s250 = scalar_select %p249, %s246, 1
      %s251 = smul.addr %s248, 2
      %s252 = sadd.s32 %s250, %s251
      %s253 = scalar_lea.vmem %s1, %s252
      %p254 = pneg %p80
      %p255 = pneg %p77
      %p256 = pneg %p106
      %p257 = pneg %p103
      %p258 = scmp.lt.s32.totalorder %s21, 1
      %s259 = scalar_select %p258, %s21, 1
      %s260 = scalar_lea.vmem %s2, %s259
      %p261 = pneg %p132
      %p262 = pneg %p129
      %p263 = scmp.lt.s32.totalorder %s21, 1
      %s264 = scalar_select %p263, %s21, 1
      %s265 = scalar_lea.vmem %s3, %s264
      %p266 = pneg %p158
      %p267 = pneg %p155
      %p268 = scmp.lt.s32.totalorder %s21, 1
      %s269 = scalar_select %p268, %s21, 1
      %s270 = scalar_lea.vmem %s4, %s269
      %p271 = pneg %p184
      %p272 = pneg %p181
      %p273 = scmp.lt.s32.totalorder %s21, 1
      %s274 = scalar_select %p273, %s21, 1
      %s275 = scalar_lea.vmem %s5, %s274
      %s276 = smul.u32 2, %s22
      %p277 = scmp.lt.s32.totalorder %s21, 1
      %s278 = scalar_select %p277, %s21, 1
      %p279 = scmp.lt.s32.totalorder %s276, 1
      %s280 = scalar_select %p279, %s276, 1
      %s281 = smul.addr %s278, 2
      %s282 = sadd.s32 %s280, %s281
      %s283 = smul.addr %s282, 4
      %s284 = scalar_lea.vmem %s0, %s283
      %s285 = smul.u32 2, %s22
      %s286 = smul.u32 2, %s22
      %p287 = scmp.lt.s32.totalorder %s21, 1
      %s288 = scalar_select %p287, %s21, 1
      %p289 = scmp.lt.s32.totalorder %s286, 1
      %s290 = scalar_select %p289, %s286, 1
      %s291 = smul.addr %s288, 2
      %s292 = sadd.s32 %s290, %s291
      %s293 = scalar_lea.vmem %s1, %s292
      %s294 = smul.u32 2, %s22
      %p295 = scmp.lt.s32.totalorder %s21, 1
      %s296 = scalar_select %p295, %s21, 1
      %s297 = scalar_lea.vmem %s2, %s296
      %p298 = scmp.lt.s32.totalorder %s21, 1
      %s299 = scalar_select %p298, %s21, 1
      %s300 = scalar_lea.vmem %s3, %s299
      %p301 = scmp.lt.s32.totalorder %s21, 1
      %s302 = scalar_select %p301, %s21, 1
      %s303 = scalar_lea.vmem %s4, %s302
      %p304 = scmp.lt.s32.totalorder %s21, 1
      %s305 = scalar_select %p304, %s21, 1
      %s306 = scalar_lea.vmem %s5, %s305
      %p307 = scmp.eq.s32.totalorder %s22, 0
      // Predicated region
      $region29: #{dice_and_ce_loss.1} parent=27 // pred_check
        %p308 = pneg %p307
      $region30: #{dice_and_ce_loss.1} parent=27 // pred_check_branch
        %310 = sbr.rel (%p308) target = $region32
      $region31: #{dice_and_ce_loss.1} parent=27 // pred_region
        %v311 = vlaneseq
        %vm312 = vcmp.ge.s32.totalorder %v311, 0
        %vm313 = vcmp.lt.s32.totalorder %v311, 256
        %vm314 = vmand %vm312, %vm313
        %315 = vst.msk [vmem:[#allocation2] sm:$0x3] %vm314, 0.0
        %316 = vst.msk [vmem:[#allocation3] sm:$0x3] %vm314, 0.0
        %317 = vst.msk [vmem:[#allocation4] sm:$0x3] %vm314, 0.0
        %318 = vst.msk [vmem:[#allocation5] sm:$0x3] %vm314, 0.0
      $region32: #{dice_and_ce_loss.1} parent=27 // pred_fallthru
        _
      %v319 = vld [vmem:[%s284] sm:$0xff]
      %v320 = vld [vmem:[%s293] sm:$0x3]
      %v321 = vlaneseq
      %v322 = vand.u32 %v321, 127
      %v323 = vadd.s32 %v322, 128
      %s324 = smul.u32 %s22, 256
      %v325 = vstv %s324
      %v326 = vadd.s32 %v322, %v325
      %v327 = vadd.s32 %v323, %v325
      %vm328 = vcmp.lt.s32.totalorder %v326, 256
      %vm329 = vcmp.lt.s32.totalorder %v327, 256
      %v330 = vsel %vm328, 1, 0
      %v331 = vsel %vm329, 1, 0
      %v332 = vcvt.s32.f32 %v330
      %v333 = vcvt.s32.f32 %v331
      %vm334 = vcmp.eq.s32.totalorder %v320, 255
      %v335 = vsel %vm334, 0, %v320
      %v336 = vsel %vm334, 0.0, 1.0
      %v339 = vcombine.low %v332, %v333
      %v341 = vunpack.c.l.s4 1966171168
      %v342 = vunpack.c.0.s8 %v341
      %v343 = vlaneseq
      %v344 = vshrl.u32 %v343, 7
      %v345 = vsub.s32 %v342, %v344
      %v346 = vrot.slane %v339, %v345
      %v348 = vunpack.c.l.s4 1966171168
      %v349 = vunpack.c.0.s8 %v348
      %v350 = vlaneseq
      %v351 = vshrl.u32 %v350, 7
      %v352 = vsub.s32 %v349, %v351
      %v353 = vrot.slane %v346, %v352
      %v355 = vmul.f32 %v336, %v353
      %v356 = vlaneseq
      %v357 = vshrl.u32 %v356, 7
      %v358 = vlaneseq
      %v359 = vshrl.u32 %v358, 7
      %v360 = vsub.s32 0, %v359
      %v361 = vrot.slane %v335, %v360
      %v362 = vlaneseq
      %v363 = vshrl.u32 %v362, 7
      %v364 = vsub.s32 1, %v363
      %v365 = vrot.slane %v335, %v364
      %vm366 = vcmp.eq.s32.totalorder %v357, %v361
      %vm367 = vcmp.eq.s32.totalorder %v357, %v365
      %v368 = vsel %vm366, 1, 0
      %v369 = vsel %vm367, 1, 0
      %v370 = vcvt.s32.f32 %v368
      %v371 = vcvt.s32.f32 %v369
      %v373 = vcombine.high %v319, %v319
      %vm375 = vcmask 1043456
      %v376 = vsel %vm375, %v319, -inf
      %v377 = vrot.slane %v376, 4
      %v378 = vmax.f32 %v376, %v377
      %v379 = vrot.slane %v378, 2
      %v380 = vmax.f32 %v378, %v379
      %v381 = vrot.slane %v380, 1
      %v382 = vmax.f32 %v380, %v381
      %v383 = vsel %vm375, %v373, -inf
      %v384 = vrot.slane %v383, 4
      %v385 = vmax.f32 %v383, %v384
      %v386 = vrot.slane %v385, 2
      %v387 = vmax.f32 %v385, %v386
      %v388 = vrot.slane %v387, 1
      %v389 = vmax.f32 %v387, %v388
      %v392 = vcombine.low %v382, %v389
      %v394 = vsub.f32 %v319, %v392
      %v395 = vmul.f32 %v394, 1.442695
      %v396 = vpow.pop %v395
      %v398 = vcombine.high %v396, %v396
      %v400 = vsel %vm375, %v396, 0.0
      %v401 = vrot.slane %v400, 4
      %v402 = vadd.f32 %v400, %v401
      %v403 = vrot.slane %v402, 2
      %v404 = vadd.f32 %v402, %v403
      %v405 = vrot.slane %v404, 1
      %v406 = vadd.f32 %v404, %v405
      %v407 = vsel %vm375, %v398, 0.0
      %v408 = vrot.slane %v407, 4
      %v409 = vadd.f32 %v407, %v408
      %v410 = vrot.slane %v409, 2
      %v411 = vadd.f32 %v409, %v410
      %v412 = vrot.slane %v411, 1
      %v413 = vadd.f32 %v411, %v412
      %v414 = vlog2.pop %v406
      %v415 = vmul.f32 %v414, 0.6931472
      %v416 = vlog2.pop %v413
      %v417 = vmul.f32 %v416, 0.6931472
      %v418 = vadd.f32 %v382, %v415
      %v419 = vadd.f32 %v389, %v417
      %v422 = vcombine.low %v370, %v371
      %v424 = vmul.f32 %v319, %v422
      %v426 = vcombine.high %v424, %v424
      %v428 = vsel %vm375, %v424, 0.0
      %v429 = vrot.slane %v428, 4
      %v430 = vadd.f32 %v428, %v429
      %v431 = vrot.slane %v430, 2
      %v432 = vadd.f32 %v430, %v431
      %v433 = vrot.slane %v432, 1
      %v434 = vadd.f32 %v432, %v433
      %v435 = vsel %vm375, %v426, 0.0
      %v436 = vrot.slane %v435, 4
      %v437 = vadd.f32 %v435, %v436
      %v438 = vrot.slane %v437, 2
      %v439 = vadd.f32 %v437, %v438
      %v440 = vrot.slane %v439, 1
      %v441 = vadd.f32 %v439, %v440
      %v442 = vsub.f32 %v418, %v434
      %v443 = vsub.f32 %v419, %v441
      %v444 = vmul.f32 %v442, %v332
      %v445 = vmul.f32 %v443, %v333
      %v446 = vxor.u32 %v319, 2147483648
      %v447 = vmul.f32 %v446, 1.442695
      %v448 = vpow.pop %v447
      %v449 = vadd.f32 %v448, 1.0
      %v450 = vrcp.pop %v449
      %v451 = vmul.f32 1.0, %v450
      %v453 = vcombine.high %v451, %v451
      %v455 = vsel %vm375, %v451, 0.0
      %v456 = vrot.slane %v455, 4
      %v457 = vadd.f32 %v455, %v456
      %v458 = vrot.slane %v457, 2
      %v459 = vadd.f32 %v457, %v458
      %v460 = vrot.slane %v459, 1
      %v461 = vadd.f32 %v459, %v460
      %v462 = vsel %vm375, %v453, 0.0
      %v463 = vrot.slane %v462, 4
      %v464 = vadd.f32 %v462, %v463
      %v465 = vrot.slane %v464, 2
      %v466 = vadd.f32 %v464, %v465
      %v467 = vrot.slane %v466, 1
      %v468 = vadd.f32 %v466, %v467
      %v469 = vmul.f32 %v461, %v332
      %v470 = vmul.f32 %v468, %v333
      %v471 = vmul.f32 %v451, %v422
      %v473 = vcombine.high %v471, %v471
      %v475 = vsel %vm375, %v471, 0.0
      %v476 = vrot.slane %v475, 4
      %v477 = vadd.f32 %v475, %v476
      %v478 = vrot.slane %v477, 2
      %v479 = vadd.f32 %v477, %v478
      %v480 = vrot.slane %v479, 1
      %v481 = vadd.f32 %v479, %v480
      %v482 = vsel %vm375, %v473, 0.0
      %v483 = vrot.slane %v482, 4
      %v484 = vadd.f32 %v482, %v483
      %v485 = vrot.slane %v484, 2
      %v486 = vadd.f32 %v484, %v485
      %v487 = vrot.slane %v486, 1
      %v488 = vadd.f32 %v486, %v487
      %v490 = vlaneseq
      %v491 = vshrl.u32 %v490, 7
      %v492 = vsub.s32 0, %v491
      %v493 = vrot.slane %v355, %v492
      %v494 = vlaneseq
      %v495 = vshrl.u32 %v494, 7
      %v496 = vsub.s32 1, %v495
      %v497 = vrot.slane %v355, %v496
      %v500 = vmul.f32 %v481, %v493
      %v501 = vmul.f32 %v488, %v497
      %v502 = vld [vmem:[#allocation2] sm:$0x3]
      %v505 = vcombine.low %v444, %v445
      %v507 = vunpack.c.l.s4 1966171168
      %v508 = vunpack.c.0.s8 %v507
      %v509 = vlaneseq
      %v510 = vshrl.u32 %v509, 7
      %v511 = vsub.s32 %v508, %v510
      %v512 = vrot.slane %v505, %v511
      %v514 = vunpack.c.l.s4 1966171168
      %v515 = vunpack.c.0.s8 %v514
      %v516 = vlaneseq
      %v517 = vshrl.u32 %v516, 7
      %v518 = vsub.s32 %v515, %v517
      %v519 = vrot.slane %v512, %v518
      %v521 = vadd.f32 %v502, %v519
      %v522 = vlaneseq
      %vm523 = vcmp.ge.s32.totalorder %v522, 0
      %vm524 = vcmp.lt.s32.totalorder %v522, 256
      %vm525 = vmand %vm523, %vm524
      %526 = vst.msk [vmem:[#allocation2] sm:$0x3] %vm525, %v521
      %v527 = vld [vmem:[#allocation3] sm:$0x3]
      %v530 = vcombine.low %v500, %v501
      %v532 = vunpack.c.l.s4 1966171168
      %v533 = vunpack.c.0.s8 %v532
      %v534 = vlaneseq
      %v535 = vshrl.u32 %v534, 7
      %v536 = vsub.s32 %v533, %v535
      %v537 = vrot.slane %v530, %v536
      %v539 = vunpack.c.l.s4 1966171168
      %v540 = vunpack.c.0.s8 %v539
      %v541 = vlaneseq
      %v542 = vshrl.u32 %v541, 7
      %v543 = vsub.s32 %v540, %v542
      %v544 = vrot.slane %v537, %v543
      %v546 = vadd.f32 %v527, %v544
      %547 = vst.msk [vmem:[#allocation3] sm:$0x3] %vm525, %v546
      %v548 = vld [vmem:[#allocation4] sm:$0x3]
      %v551 = vcombine.low %v469, %v470
      %v553 = vunpack.c.l.s4 1966171168
      %v554 = vunpack.c.0.s8 %v553
      %v555 = vlaneseq
      %v556 = vshrl.u32 %v555, 7
      %v557 = vsub.s32 %v554, %v556
      %v558 = vrot.slane %v551, %v557
      %v560 = vunpack.c.l.s4 1966171168
      %v561 = vunpack.c.0.s8 %v560
      %v562 = vlaneseq
      %v563 = vshrl.u32 %v562, 7
      %v564 = vsub.s32 %v561, %v563
      %v565 = vrot.slane %v558, %v564
      %v567 = vadd.f32 %v548, %v565
      %568 = vst.msk [vmem:[#allocation4] sm:$0x3] %vm525, %v567
      %v569 = vld [vmem:[#allocation5] sm:$0x3]
      %v570 = vadd.f32 %v569, %v355
      %571 = vst.msk [vmem:[#allocation5] sm:$0x3] %vm525, %v570
      // Predicated region
      $region33: #{dice_and_ce_loss.1} parent=27 // pred_check
        %p572 = pneg %p307
      $region34: #{dice_and_ce_loss.1} parent=27 // pred_check_branch
        %574 = sbr.rel (%p572) target = $region36
      $region35: #{dice_and_ce_loss.1} parent=27 // pred_region
        %v575 = vld [vmem:[#allocation2] sm:$0x3]
        %v577 = vlaneseq
        %v578 = vshrl.u32 %v577, 7
        %v579 = vsub.s32 0, %v578
        %v580 = vrot.slane %v575, %v579
        %v581 = vlaneseq
        %v582 = vshrl.u32 %v581, 7
        %v583 = vsub.s32 1, %v582
        %v584 = vrot.slane %v575, %v583
        %vm587 = vcmask 1040384
        %v588 = vsel %vm587, %v580, 0.0
        %v589 = vsel %vm587, %v584, 0.0
        %v590 = vadd.f32 %v588, %v589
        %591 = vadd.xlane.f32.xlu0 %v590
        %v592 = vpop.xlane.xlu0 %591
        %vm593 = vcmask 0
        %594 = vst.msk [vmem:[%s297] sm:$0x1] %vm593, %v592
        %v595 = vld [vmem:[#allocation3] sm:$0x3]
        %v597 = vlaneseq
        %v598 = vshrl.u32 %v597, 7
        %v599 = vsub.s32 0, %v598
        %v600 = vrot.slane %v595, %v599
        %v601 = vlaneseq
        %v602 = vshrl.u32 %v601, 7
        %v603 = vsub.s32 1, %v602
        %v604 = vrot.slane %v595, %v603
        %v607 = vsel %vm587, %v600, 0.0
        %v608 = vsel %vm587, %v604, 0.0
        %v609 = vadd.f32 %v607, %v608
        %610 = vadd.xlane.f32.xlu0 %v609
        %v611 = vpop.xlane.xlu0 %610
        %612 = vst.msk [vmem:[%s300] sm:$0x1] %vm593, %v611
        %v613 = vld [vmem:[#allocation4] sm:$0x3]
        %v615 = vlaneseq
        %v616 = vshrl.u32 %v615, 7
        %v617 = vsub.s32 0, %v616
        %v618 = vrot.slane %v613, %v617
        %v619 = vlaneseq
        %v620 = vshrl.u32 %v619, 7
        %v621 = vsub.s32 1, %v620
        %v622 = vrot.slane %v613, %v621
        %v625 = vsel %vm587, %v618, 0.0
        %v626 = vsel %vm587, %v622, 0.0
        %v627 = vadd.f32 %v625, %v626
        %628 = vadd.xlane.f32.xlu0 %v627
        %v629 = vpop.xlane.xlu0 %628
        %630 = vst.msk [vmem:[%s303] sm:$0x1] %vm593, %v629
        %v631 = vld [vmem:[#allocation5] sm:$0x3]
        %v633 = vlaneseq
        %v634 = vshrl.u32 %v633, 7
        %v635 = vsub.s32 0, %v634
        %v636 = vrot.slane %v631, %v635
        %v637 = vlaneseq
        %v638 = vshrl.u32 %v637, 7
        %v639 = vsub.s32 1, %v638
        %v640 = vrot.slane %v631, %v639
        %v643 = vsel %vm587, %v636, 0.0
        %v644 = vsel %vm587, %v640, 0.0
        %v645 = vadd.f32 %v643, %v644
        %646 = vadd.xlane.f32.xlu0 %v645
        %v647 = vpop.xlane.xlu0 %646
        %648 = vst.msk [vmem:[%s306] sm:$0x1] %vm593, %v647
      $region36: #{dice_and_ce_loss.1} parent=27 // pred_fallthru
        _
      %p649 = scmp.lt.s32.totalorder %s21, 1
      %s650 = scalar_select %p649, %s21, 1
      %s651 = scalar_lea.vmem %s2, %s650
      %p652 = scmp.lt.s32.totalorder %s21, 1
      %s653 = scalar_select %p652, %s21, 1
      %s654 = scalar_lea.vmem %s3, %s653
      %p655 = scmp.lt.s32.totalorder %s21, 1
      %s656 = scalar_select %p655, %s21, 1
      %s657 = scalar_lea.vmem %s4, %s656
      %p658 = scmp.lt.s32.totalorder %s21, 1
      %s659 = scalar_select %p658, %s21, 1
      %s660 = scalar_lea.vmem %s5, %s659
      // Predicated region
      $region37: #{dice_and_ce_loss.1} parent=27 // pred_check
        %p661 = pneg %p103
      $region38: #{dice_and_ce_loss.1} parent=27 // pred_check_branch
        %663 = sbr.rel (%p661) target = $region40
      $region39: #{dice_and_ce_loss.1} parent=27 // pred_region
        _
      $region40: #{dice_and_ce_loss.1} parent=27 // pred_fallthru
        _
      // Predicated region
      $region41: #{dice_and_ce_loss.1} parent=27 // pred_check
        %p664 = pneg %p129
      $region42: #{dice_and_ce_loss.1} parent=27 // pred_check_branch
        %666 = sbr.rel (%p664) target = $region44
      $region43: #{dice_and_ce_loss.1} parent=27 // pred_region
        _
      $region44: #{dice_and_ce_loss.1} parent=27 // pred_fallthru
        _
      // Predicated region
      $region45: #{dice_and_ce_loss.1} parent=27 // pred_check
        %p667 = pneg %p155
      $region46: #{dice_and_ce_loss.1} parent=27 // pred_check_branch
        %669 = sbr.rel (%p667) target = $region48
      $region47: #{dice_and_ce_loss.1} parent=27 // pred_region
        _
      $region48: #{dice_and_ce_loss.1} parent=27 // pred_fallthru
        _
      // Predicated region
      $region49: #{dice_and_ce_loss.1} parent=27 // pred_check
        %p670 = pneg %p181
      $region50: #{dice_and_ce_loss.1} parent=27 // pred_check_branch
        %672 = sbr.rel (%p670) target = $region52
      $region51: #{dice_and_ce_loss.1} parent=27 // pred_region
        _
      $region52: #{dice_and_ce_loss.1} parent=27 // pred_fallthru
        _
    $region28: #{dice_and_ce_loss.1} parent=5 // pred_fallthru
      _
    %p673 = scmp.le.s32.totalorder 2, %s12
    // Predicated region
    $region53: #{dice_and_ce_loss.1} parent=5 // pred_check
      %p674 = pneg %p673
    $region54: #{dice_and_ce_loss.1} parent=5 // pred_check_branch
      %676 = sbr.rel (%p674) target = $region56
    $region55: #{dice_and_ce_loss.1} parent=5 // pred_region
      %s677 = ssub.s32 %s12, 2
      // Predicated region
      $region57: #{dice_and_ce_loss.1} parent=55 // pred_check
        %p678 = pneg %p109
      $region58: #{dice_and_ce_loss.1} parent=55 // pred_check_branch
        %680 = sbr.rel (%p678) target = $region60
      $region59: #{dice_and_ce_loss.1} parent=55 // pred_region
        %p681 = scmp.lt.s32.totalorder %s23, 1
        %s682 = scalar_select %p681, %s23, 1
        %s683 = scalar_lea.vmem %s2, %s682
      $region60: #{dice_and_ce_loss.1} parent=55 // pred_fallthru
        _
      // Predicated region
      $region61: #{dice_and_ce_loss.1} parent=55 // pred_check
        %p684 = pneg %p135
      $region62: #{dice_and_ce_loss.1} parent=55 // pred_check_branch
        %686 = sbr.rel (%p684) target = $region64
      $region63: #{dice_and_ce_loss.1} parent=55 // pred_region
        %p687 = scmp.lt.s32.totalorder %s23, 1
        %s688 = scalar_select %p687, %s23, 1
        %s689 = scalar_lea.vmem %s3, %s688
      $region64: #{dice_and_ce_loss.1} parent=55 // pred_fallthru
        _
      // Predicated region
      $region65: #{dice_and_ce_loss.1} parent=55 // pred_check
        %p690 = pneg %p161
      $region66: #{dice_and_ce_loss.1} parent=55 // pred_check_branch
        %692 = sbr.rel (%p690) target = $region68
      $region67: #{dice_and_ce_loss.1} parent=55 // pred_region
        %p693 = scmp.lt.s32.totalorder %s23, 1
        %s694 = scalar_select %p693, %s23, 1
        %s695 = scalar_lea.vmem %s4, %s694
      $region68: #{dice_and_ce_loss.1} parent=55 // pred_fallthru
        _
      // Predicated region
      $region69: #{dice_and_ce_loss.1} parent=55 // pred_check
        %p696 = pneg %p187
      $region70: #{dice_and_ce_loss.1} parent=55 // pred_check_branch
        %698 = sbr.rel (%p696) target = $region72
      $region71: #{dice_and_ce_loss.1} parent=55 // pred_region
        %p699 = scmp.lt.s32.totalorder %s23, 1
        %s700 = scalar_select %p699, %s23, 1
        %s701 = scalar_lea.vmem %s5, %s700
      $region72: #{dice_and_ce_loss.1} parent=55 // pred_fallthru
        _
    $region56: #{dice_and_ce_loss.1} parent=5 // pred_fallthru
      _
  $region6: #{dice_and_ce_loss.1} parent=0 // loop_footer
    %s16 = sadd.s32 1, %s12
  $region7: #{dice_and_ce_loss.1} parent=0 // loop_footer_branch
    %11 = sbr.rel target = $region3
  $region8: #{dice_and_ce_loss.1} parent=0 // loop_exit
    _

</llo_original>
